<compile_context>
chip_gen: v6e
topology: v6e:2x2x1
jax: 0.10.0
libtpu: 0.0.40
codegen_flags: <defaults>
</compile_context>

<pallas_src>
import numpy as np
import jax
import jax.numpy as jnp
from jax.experimental import pallas as pl
from jax.experimental.pallas import tpu as pltpu


# ----------------------------- configuration -------------------------------
LEVELS = [8, 5, 5, 5]          # codebook_dim = 4
DIM = 32                       # feature dim != effective_codebook_dim -> projections
NUM_CODEBOOKS = 1              # keep_num_codebooks_dim = False
EPS = 1e-3
CODE_D = len(LEVELS) * NUM_CODEBOOKS   # effective_codebook_dim = 4

PACK = 4                       # rows packed into the 128-lane axis
PACKED_DIM = PACK * DIM        # 128  (fully lane-dense out store)
PACKED_D = PACK * CODE_D       # 16

# Compile-time FSQ constants (numpy; passed to the kernel as tiny inputs).
_LV = np.asarray(LEVELS, dtype=np.float32)
_HALF_L = ((_LV - 1.0) * (1.0 + EPS) / 2.0).astype(np.float32)                       # (d,)
_OFFSET = np.where(np.asarray(LEVELS) % 2 == 0, 0.5, 0.0).astype(np.float32)         # (d,)
_SHIFT = np.arctanh(_OFFSET / _HALF_L).astype(np.float32)                             # (d,)
_HALF_W = (np.asarray(LEVELS, dtype=np.int64) // 2).astype(np.float32)                # (d,)
_INV_HALF_W = (1.0 / _HALF_W).astype(np.float32)                                      # (d,)
_BASIS = np.cumprod(np.asarray([1] + list(LEVELS[:-1]), dtype=np.int64)).astype(np.float32)  # (d,)
_IDX_BASE = float(np.sum(_HALF_W * _BASIS))   # Python scalar -> legal in-kernel constant


def _round_up(x, m):
    return ((x + m - 1) // m) * m


# ------------------------------- kernel -------------------------------------
def fsq_kernel(x_ref, win_ref, bin_ref, shift_ref, hl_ref, off_ref,
               wq_ref, bout_ref, out_ref, idx_ref):
    # project_in for 4 packed rows at once via block-diagonal W_in^T:
    #   x_ref   : (TM4, 128)   win_ref : (128, 16)   -> h : (TM4, 16)
    h = jnp.dot(x_ref[...], win_ref[...],
                preferred_element_type=jnp.float32) + bin_ref[...]

    # bound + round_ste (forward == round): integer quantization levels q.
    q = jnp.round(jnp.tanh(h + shift_ref[...]) * hl_ref[...] - off_ref[...])  # (TM4, 16)

    # Single fused MXU pass on q with wq_ref (16, 128 + 4):
    #   columns [:128]    : block-diag ((1/half_w) * W_out^T)  == packed project_out
    #   columns [128:132] : per-packed-row basis columns       == index - sum(half_w*basis)
    r = jnp.dot(q, wq_ref[...], preferred_element_type=jnp.float32)           # (TM4, 132)

    out_ref[...] = (r[:, :PACKED_DIM] + bout_ref[...]).astype(out_ref.dtype)  # dense 128-lane store
    idx_ref[...] = jnp.round(r[:, PACKED_DIM:] + _IDX_BASE).astype(jnp.int32) # 4-lane store


# ------------------------------- wrapper -------------------------------------
def fsq_forward(features, w_in, b_in, w_out, b_out, *, block_m=32768):
    """features: (B, N, dim) f32. Returns (out (B, N, dim), indices (B, N) int32)."""
    B, N, dim = features.shape
    assert dim == DIM
    M = B * N
    d = CODE_D

    x = features.reshape(M, dim)
    # Pad rows so the P=4 lane packing is exact (no-op for the test shapes).
    m_pad = _round_up(M, PACK)
    if m_pad != M:
        x = jnp.pad(x, ((0, m_pad - M), (0, 0)))
    m4 = m_pad // PACK
    x_packed = x.reshape(m4, PACKED_DIM)          # free row-major reshape, same HBM bytes

    eye = jnp.eye(PACK, dtype=jnp.float32)
    # Block-diagonal project_in weight: (128, 16), 4 copies of W_in^T on the diagonal.
    win_bd = jnp.kron(eye, w_in.T.astype(jnp.float32))
    # Fused output weight: block-diag of (1/half_w)-scaled W_out^T (16,128) plus
    # per-packed-row basis columns (16,4)  ->  (16, 132).
    wq_block = jnp.kron(eye, (w_out.T * jnp.asarray(_INV_HALF_W)[:, None]).astype(jnp.float32))
    basis_cols = jnp.kron(eye, jnp.asarray(_BASIS).reshape(CODE_D, 1))
    wq_aug = jnp.concatenate([wq_block, basis_cols], axis=1)

    # Per-level constants tiled across the 4 packed rows (tiny VMEM-resident inputs).
    bin_t = jnp.tile(b_in.reshape(1, d).astype(jnp.float32), (1, PACK))       # (1, 16)
    shift_t = jnp.asarray(np.tile(_SHIFT, PACK)).reshape(1, PACKED_D)
    hl_t = jnp.asarray(np.tile(_HALF_L, PACK)).reshape(1, PACKED_D)
    off_t = jnp.asarray(np.tile(_OFFSET, PACK)).reshape(1, PACKED_D)
    bout_t = jnp.tile(b_out.reshape(1, dim).astype(jnp.float32), (1, PACK))   # (1, 128)

    # Row tiling over packed rows: big tiles amortize per-step overhead; keep the
    # grid even (>1 step) so both v7x TensorCores get balanced work.
    tm4 = min(max(block_m // PACK, 8), _round_up(m4, 8))
    tm4 = _round_up(tm4, 8)
    steps = pl.cdiv(m4, tm4)
    if steps > 1 and steps % 2 == 1:
        tm4 = _round_up(pl.cdiv(m4, steps + 1), 8)
        steps = pl.cdiv(m4, tm4)
    grid = (steps,)

    # Double-buffered working set: x tile + out tile + idx tile (weights are tiny).
    vmem_need = 2 * (tm4 * PACKED_DIM * 4 * 2 + tm4 * PACK * 4) + (4 << 20)
    vmem_limit = min(max(vmem_need, 8 << 20), 40 << 20)   # headroom on v7x's 64 MiB VMEM

    cost = pl.CostEstimate(
        flops=2 * m4 * (PACKED_DIM * PACKED_D + PACKED_D * (PACKED_DIM + PACK)),
        transcendentals=m4 * PACKED_D,
        bytes_accessed=m4 * PACKED_DIM * 4 * 2 + m4 * PACK * 4
        + 4 * (PACKED_DIM * PACKED_D + PACKED_D * (PACKED_DIM + PACK) + 4 * PACKED_D + PACKED_DIM),
    )

    out_p, idx_p = pl.pallas_call(
        fsq_kernel,
        out_shape=(jax.ShapeDtypeStruct((m4, PACKED_DIM), features.dtype),
                   jax.ShapeDtypeStruct((m4, PACK), jnp.int32)),
        grid_spec=pltpu.PrefetchScalarGridSpec(
            num_scalar_prefetch=0,
            grid=grid,
            in_specs=[
                pl.BlockSpec((tm4, PACKED_DIM), lambda i: (i, 0)),            # packed x tile
                pl.BlockSpec((PACKED_DIM, PACKED_D), lambda i: (0, 0)),       # block-diag W_in^T
                pl.BlockSpec((1, PACKED_D), lambda i: (0, 0)),                # b_in (tiled)
                pl.BlockSpec((1, PACKED_D), lambda i: (0, 0)),                # shift (tiled)
                pl.BlockSpec((1, PACKED_D), lambda i: (0, 0)),                # half_l (tiled)
                pl.BlockSpec((1, PACKED_D), lambda i: (0, 0)),                # offset (tiled)
                pl.BlockSpec((PACKED_D, PACKED_DIM + PACK), lambda i: (0, 0)),  # fused out weight
                pl.BlockSpec((1, PACKED_DIM), lambda i: (0, 0)),              # b_out (tiled)
            ],
            out_specs=(
                pl.BlockSpec((tm4, PACKED_DIM), lambda i: (i, 0)),            # packed out tile
                pl.BlockSpec((tm4, PACK), lambda i: (i, 0)),                  # 4-wide idx tile
            ),
        ),
        compiler_params=pltpu.CompilerParams(
            dimension_semantics=("parallel",),
            vmem_limit_bytes=vmem_limit,
        ),
        cost_estimate=cost,
    )(x_packed, win_bd, bin_t, shift_t, hl_t, off_t, wq_aug, bout_t)

    out = out_p.reshape(m_pad, DIM)[:M].reshape(B, N, DIM)
    # keep_num_codebooks_dim = False (single codebook): indices shape (B, N)
    indices = idx_p.reshape(m_pad)[:M].reshape(B, N)
    return out, indices


# ------------------------------ reference -----------------------------------
def fsq_reference(features, w_in, b_in, w_out, b_out, levels):
    lv = jnp.asarray(levels, dtype=jnp.float32)
    half_l = (lv - 1.0) * (1.0 + EPS) / 2.0
    offset = jnp.where(jnp.asarray(levels) % 2 == 0, 0.5, 0.0)
    shift = jnp.arctanh(offset / half_l)
    half_w = jnp.asarray([l // 2 for l in levels], dtype=jnp.float32)
    basis = jnp.asarray(np.cumprod([1] + list(levels[:-1])), dtype=jnp.float32)

    h = features @ w_in.T + b_in
    bounded = jnp.tanh(h + shift) * half_l - offset
    codes = jnp.round(bounded) / half_w
    idx = jnp.sum((codes * half_w + half_w) * basis, axis=-1).astype(jnp.int32)
    out = codes @ w_out.T + b_out
    return out, idx


# --------------------------------- main --------------------------------------
if __name__ == "__main__":
    key = jax.random.PRNGKey(0)
    k_x, k_wi, k_bi, k_wo, k_bo = jax.random.split(key, 5)

    B, N = 2, 8
    d = CODE_D

    # Deterministic parameter init (mimicking nn.Linear uniform(-1/sqrt(fan_in), ...)).
    lim_in = 1.0 / np.sqrt(DIM)
    lim_out = 1.0 / np.sqrt(d)
    w_in = jax.random.uniform(k_wi, (d, DIM), jnp.float32, -lim_in, lim_in)
    b_in = jax.random.uniform(k_bi, (d,), jnp.float32, -lim_in, lim_in)
    w_out = jax.random.uniform(k_wo, (DIM, d), jnp.float32, -lim_out, lim_out)
    b_out = jax.random.uniform(k_bo, (DIM,), jnp.float32, -lim_out, lim_out)

    features = jax.random.normal(k_x, (B, N, DIM), jnp.float32)

    # TODO(synk): round_ste's straight-through gradient is a backward-pass concept;
    # only the forward (plain round) is implemented here.
    out, indices = fsq_forward(features, w_in, b_in, w_out, b_out)
    out = jax.block_until_ready(out)
    indices = jax.block_until_ready(indices)

    # Cross-check against pure-JAX reference.
    ref_out, ref_idx = fsq_reference(features, w_in, b_in, w_out, b_out, LEVELS)
    np.testing.assert_allclose(np.asarray(out), np.asarray(ref_out), rtol=1e-5, atol=1e-5)
    np.testing.assert_array_equal(np.asarray(indices), np.asarray(ref_idx))
    assert out.shape == (B, N, DIM) and out.dtype == jnp.float32
    assert indices.shape == (B, N) and indices.dtype == jnp.int32

    print("KERNEL_OK")
</pallas_src>

<mosaic_0001>
module attributes {stable_mosaic.version = 11 : i64} {
  func.func @fsq_kernel(%arg0: i32, %arg1: memref<8x128xf32, #tpu.memory_space<vmem>>, %arg2: memref<128x16xf32, #tpu.memory_space<vmem>>, %arg3: memref<1x16xf32, #tpu.memory_space<vmem>>, %arg4: memref<1x16xf32, #tpu.memory_space<vmem>>, %arg5: memref<1x16xf32, #tpu.memory_space<vmem>>, %arg6: memref<1x16xf32, #tpu.memory_space<vmem>>, %arg7: memref<16x132xf32, #tpu.memory_space<vmem>>, %arg8: memref<1x128xf32, #tpu.memory_space<vmem>>, %arg9: memref<8x128xf32, #tpu.memory_space<vmem>>, %arg10: memref<8x4xi32, #tpu.memory_space<vmem>>) attributes {dimension_semantics = [#tpu.dimension_semantics<parallel>], iteration_bounds = array<i64: 1>, scalar_prefetch = 0 : i64, scratch_operands = 0 : i64, tpu.core_type = #tpu.core_type<tc>, window_params = [{transform_indices = @transform_0, window_bounds = array<i64: 8, 128>}, {pipeline_mode = #tpu.pipeline_mode<synchronous>, transform_indices = @transform_1, window_bounds = array<i64: 128, 16>}, {pipeline_mode = #tpu.pipeline_mode<synchronous>, transform_indices = @transform_2, window_bounds = array<i64: 1, 16>}, {pipeline_mode = #tpu.pipeline_mode<synchronous>, transform_indices = @transform_3, window_bounds = array<i64: 1, 16>}, {pipeline_mode = #tpu.pipeline_mode<synchronous>, transform_indices = @transform_4, window_bounds = array<i64: 1, 16>}, {pipeline_mode = #tpu.pipeline_mode<synchronous>, transform_indices = @transform_5, window_bounds = array<i64: 1, 16>}, {pipeline_mode = #tpu.pipeline_mode<synchronous>, transform_indices = @transform_6, window_bounds = array<i64: 16, 132>}, {pipeline_mode = #tpu.pipeline_mode<synchronous>, transform_indices = @transform_7, window_bounds = array<i64: 1, 128>}, {transform_indices = @transform_8, window_bounds = array<i64: 8, 128>}, {transform_indices = @transform_9, window_bounds = array<i64: 8, 4>}]} {
    %c0 = arith.constant 0 : index
    %c0_0 = arith.constant 0 : index
    %0 = vector.load %arg1[%c0, %c0_0] : memref<8x128xf32, #tpu.memory_space<vmem>>, vector<8x128xf32>
    %c0_1 = arith.constant 0 : index
    %c0_2 = arith.constant 0 : index
    %1 = vector.load %arg2[%c0_1, %c0_2] : memref<128x16xf32, #tpu.memory_space<vmem>>, vector<128x16xf32>
    %cst = arith.constant dense<0.000000e+00> : vector<8x16xf32>
    %2 = tpu.matmul %0, %1, %cst {dimension_numbers = #tpu.dot_dimension_numbers<[1], [0], [0], [1], [0, 0, 1, 1], [], []>} : vector<8x128xf32>, vector<128x16xf32>, vector<8x16xf32> -> vector<8x16xf32>
    %c0_3 = arith.constant 0 : index
    %c0_4 = arith.constant 0 : index
    %3 = vector.load %arg3[%c0_3, %c0_4] : memref<1x16xf32, #tpu.memory_space<vmem>>, vector<1x16xf32>
    %4 = vector.broadcast %3 : vector<1x16xf32> to vector<8x16xf32>
    %5 = arith.addf %2, %4 : vector<8x16xf32>
    %c0_5 = arith.constant 0 : index
    %c0_6 = arith.constant 0 : index
    %6 = vector.load %arg4[%c0_5, %c0_6] : memref<1x16xf32, #tpu.memory_space<vmem>>, vector<1x16xf32>
    %7 = vector.broadcast %6 : vector<1x16xf32> to vector<8x16xf32>
    %8 = arith.addf %5, %7 : vector<8x16xf32>
    %9 = math.tanh %8 : vector<8x16xf32>
    %c0_7 = arith.constant 0 : index
    %c0_8 = arith.constant 0 : index
    %10 = vector.load %arg5[%c0_7, %c0_8] : memref<1x16xf32, #tpu.memory_space<vmem>>, vector<1x16xf32>
    %11 = vector.broadcast %10 : vector<1x16xf32> to vector<8x16xf32>
    %12 = arith.mulf %9, %11 : vector<8x16xf32>
    %c0_9 = arith.constant 0 : index
    %c0_10 = arith.constant 0 : index
    %13 = vector.load %arg6[%c0_9, %c0_10] : memref<1x16xf32, #tpu.memory_space<vmem>>, vector<1x16xf32>
    %14 = vector.broadcast %13 : vector<1x16xf32> to vector<8x16xf32>
    %15 = arith.subf %12, %14 : vector<8x16xf32>
    %16 = math.roundeven %15 : vector<8x16xf32>
    %c0_11 = arith.constant 0 : index
    %c0_12 = arith.constant 0 : index
    %17 = vector.load %arg7[%c0_11, %c0_12] : memref<16x132xf32, #tpu.memory_space<vmem>>, vector<16x132xf32>
    %cst_13 = arith.constant dense<0.000000e+00> : vector<8x132xf32>
    %18 = tpu.matmul %16, %17, %cst_13 {dimension_numbers = #tpu.dot_dimension_numbers<[1], [0], [0], [1], [0, 0, 1, 1], [], []>} : vector<8x16xf32>, vector<16x132xf32>, vector<8x132xf32> -> vector<8x132xf32>
    %19 = vector.extract_strided_slice %18 {offsets = [0, 0], sizes = [8, 128], strides = [1, 1]} : vector<8x132xf32> to vector<8x128xf32>
    %c0_14 = arith.constant 0 : index
    %c0_15 = arith.constant 0 : index
    %20 = vector.load %arg8[%c0_14, %c0_15] : memref<1x128xf32, #tpu.memory_space<vmem>>, vector<1x128xf32>
    %21 = vector.broadcast %20 : vector<1x128xf32> to vector<8x128xf32>
    %22 = arith.addf %19, %21 : vector<8x128xf32>
    %c0_16 = arith.constant 0 : index
    %c0_17 = arith.constant 0 : index
    %23 = vector.load %arg9[%c0_16, %c0_17] : memref<8x128xf32, #tpu.memory_space<vmem>>, vector<8x128xf32>
    tpu.vector_store %arg9[%c0_16, %c0_17], %22 {strides = array<i32>} : memref<8x128xf32, #tpu.memory_space<vmem>>, vector<8x128xf32>,
    %24 = vector.extract_strided_slice %18 {offsets = [0, 128], sizes = [8, 4], strides = [1, 1]} : vector<8x132xf32> to vector<8x4xf32>
    %cst_18 = arith.constant 5.000000e+02 : f32
    %25 = vector.broadcast %cst_18 : f32 to vector<8x4xf32>
    %26 = arith.addf %24, %25 : vector<8x4xf32>
    %27 = math.roundeven %26 : vector<8x4xf32>
    %28 = arith.fptosi %27 : vector<8x4xf32> to vector<8x4xi32>
    %c0_19 = arith.constant 0 : index
    %c0_20 = arith.constant 0 : index
    %29 = vector.load %arg10[%c0_19, %c0_20] : memref<8x4xi32, #tpu.memory_space<vmem>>, vector<8x4xi32>
    tpu.vector_store %arg10[%c0_19, %c0_20], %28 {strides = array<i32>} : memref<8x4xi32, #tpu.memory_space<vmem>>, vector<8x4xi32>,
    return
  }
  func.func @transform_0(%arg0: i32) -> (i32, i32) {
    %c0_i32 = arith.constant 0 : i32
    %c0_i32_0 = arith.constant 0 : i32
    return %arg0, %c0_i32 : i32, i32
  }
  func.func @transform_1(%arg0: i32) -> (i32, i32) {
    %c0_i32 = arith.constant 0 : i32
    %c0_i32_0 = arith.constant 0 : i32
    %c0_i32_1 = arith.constant 0 : i32
    return %c0_i32, %c0_i32_0 : i32, i32
  }
  func.func @transform_2(%arg0: i32) -> (i32, i32) {
    %c0_i32 = arith.constant 0 : i32
    %c0_i32_0 = arith.constant 0 : i32
    %c0_i32_1 = arith.constant 0 : i32
    return %c0_i32, %c0_i32_0 : i32, i32
  }
  func.func @transform_3(%arg0: i32) -> (i32, i32) {
    %c0_i32 = arith.constant 0 : i32
    %c0_i32_0 = arith.constant 0 : i32
    %c0_i32_1 = arith.constant 0 : i32
    return %c0_i32, %c0_i32_0 : i32, i32
  }
  func.func @transform_4(%arg0: i32) -> (i32, i32) {
    %c0_i32 = arith.constant 0 : i32
    %c0_i32_0 = arith.constant 0 : i32
    %c0_i32_1 = arith.constant 0 : i32
    return %c0_i32, %c0_i32_0 : i32, i32
  }
  func.func @transform_5(%arg0: i32) -> (i32, i32) {
    %c0_i32 = arith.constant 0 : i32
    %c0_i32_0 = arith.constant 0 : i32
    %c0_i32_1 = arith.constant 0 : i32
    return %c0_i32, %c0_i32_0 : i32, i32
  }
  func.func @transform_6(%arg0: i32) -> (i32, i32) {
    %c0_i32 = arith.constant 0 : i32
    %c0_i32_0 = arith.constant 0 : i32
    %c0_i32_1 = arith.constant 0 : i32
    return %c0_i32, %c0_i32_0 : i32, i32
  }
  func.func @transform_7(%arg0: i32) -> (i32, i32) {
    %c0_i32 = arith.constant 0 : i32
    %c0_i32_0 = arith.constant 0 : i32
    %c0_i32_1 = arith.constant 0 : i32
    return %c0_i32, %c0_i32_0 : i32, i32
  }
  func.func @transform_8(%arg0: i32) -> (i32, i32) {
    %c0_i32 = arith.constant 0 : i32
    %c0_i32_0 = arith.constant 0 : i32
    return %arg0, %c0_i32 : i32, i32
  }
  func.func @transform_9(%arg0: i32) -> (i32, i32) {
    %c0_i32 = arith.constant 0 : i32
    %c0_i32_0 = arith.constant 0 : i32
    return %arg0, %c0_i32 : i32, i32
  }
}

</mosaic_0001>

<llo_original>
// kernel: tpu_custom_call.1
$region0: #{tpu_custom_call.1}
  #allocation0 [shape = 'u32[]', space=smem, size = 0x4, offset = 0x4, fixed_abs, tag = 'smem constant byte address 0x4 - core index']
  #allocation1 [shape = 'u32[144,128]{1,0:T(1,128)}', space=vmem, size = 0x12000, scoped, tag = 'internal scratch']
  %s0 = inlined_call_operand.vmem [shape: f32[4,128], index: 0, kind: input, shape index: {}]
  %s1 = inlined_call_operand.vmem [shape: f32[128,16], index: 1, kind: input, shape index: {}]
  %s2 = inlined_call_operand.vmem [shape: f32[1,16], index: 2, kind: input, shape index: {}]
  %s3 = inlined_call_operand.vmem [shape: f32[1,16], index: 3, kind: input, shape index: {}]
  %s4 = inlined_call_operand.vmem [shape: f32[1,16], index: 4, kind: input, shape index: {}]
  %s5 = inlined_call_operand.vmem [shape: f32[1,16], index: 5, kind: input, shape index: {}]
  %s6 = inlined_call_operand.vmem [shape: f32[16,132], index: 6, kind: input, shape index: {}]
  %s7 = inlined_call_operand.vmem [shape: f32[1,128], index: 7, kind: input, shape index: {}]
  %s8 = inlined_call_operand.hbm [shape: f32[4,128], index: 8, kind: output, shape index: {0}]
  %s9 = inlined_call_operand.hbm [shape: s32[4,4], index: 9, kind: output, shape index: {1}]
  %10 = xla_tuple %s8, %s9
  %s11 = sld [smem:[#allocation0]]
  $region50: #{tpu_custom_call.1} parent=0
    _
  %s13 = ssub.s32 1, %s11
  %s14 = scalar_select 0, %s13, %s11
  $region1: #{tpu_custom_call.1} parent=0
    #allocation2 [shape = 'u8[4096]{0}', space=vmem, size = 0x1000, scoped, tag = 'output window, operand 0, single buffered']
    #allocation3 [shape = 's32[1]{0}', space=sflag, size = 0x4, scoped, tag = 'scoped memory for tpu_custom_call.1']
    #allocation4 [shape = 'u8[4096]{0}', space=vmem, size = 0x1000, scoped, tag = 'output window, operand 1, single buffered']
    #allocation5 [shape = 's32[1]{0}', space=sflag, size = 0x4, scoped, tag = 'scoped memory for tpu_custom_call.1']
    %15 = vsyncpa [#allocation3], 0
    %16 = vsyncpa [#allocation5], 0
    // Predicated region
    $region2: #{tpu_custom_call.1} parent=1 // pred_check
      _
    $region3: #{tpu_custom_call.1} parent=1 // pred_check_branch
      %18 = sbr.rel (0) target = $region5
    $region4: #{tpu_custom_call.1} parent=1 // pred_region
      _
    $region5: #{tpu_custom_call.1} parent=1 // pred_fallthru
      _
    // Predicated region
    $region6: #{tpu_custom_call.1} parent=1 // pred_check
      _
    $region7: #{tpu_custom_call.1} parent=1 // pred_check_branch
      %20 = sbr.rel (0) target = $region9
    $region8: #{tpu_custom_call.1} parent=1 // pred_region
      _
    $region9: #{tpu_custom_call.1} parent=1 // pred_fallthru
      _
    // Predicated region
    $region10: #{tpu_custom_call.1} parent=1 // pred_check
      _
    $region11: #{tpu_custom_call.1} parent=1 // pred_check_branch
      %22 = sbr.rel (0) target = $region13
    $region12: #{tpu_custom_call.1} parent=1 // pred_region
      _
    $region13: #{tpu_custom_call.1} parent=1 // pred_fallthru
      _
    // Predicated region
    $region14: #{tpu_custom_call.1} parent=1 // pred_check
      _
    $region15: #{tpu_custom_call.1} parent=1 // pred_check_branch
      %24 = sbr.rel (0) target = $region17
    $region16: #{tpu_custom_call.1} parent=1 // pred_region
      _
    $region17: #{tpu_custom_call.1} parent=1 // pred_fallthru
      _
    // Predicated region
    $region18: #{tpu_custom_call.1} parent=1 // pred_check
      _
    $region19: #{tpu_custom_call.1} parent=1 // pred_check_branch
      %26 = sbr.rel (0) target = $region21
    $region20: #{tpu_custom_call.1} parent=1 // pred_region
      _
    $region21: #{tpu_custom_call.1} parent=1 // pred_fallthru
      _
    // Predicated region
    $region22: #{tpu_custom_call.1} parent=1 // pred_check
      _
    $region23: #{tpu_custom_call.1} parent=1 // pred_check_branch
      %28 = sbr.rel (0) target = $region25
    $region24: #{tpu_custom_call.1} parent=1 // pred_region
      _
    $region25: #{tpu_custom_call.1} parent=1 // pred_fallthru
      _
    // Predicated region
    $region26: #{tpu_custom_call.1} parent=1 // pred_check
      _
    $region27: #{tpu_custom_call.1} parent=1 // pred_check_branch
      %30 = sbr.rel (0) target = $region29
    $region28: #{tpu_custom_call.1} parent=1 // pred_region
      _
    $region29: #{tpu_custom_call.1} parent=1 // pred_fallthru
      _
    // Predicated region
    $region30: #{tpu_custom_call.1} parent=1 // pred_check
      _
    $region31: #{tpu_custom_call.1} parent=1 // pred_check_branch
      %32 = sbr.rel (0) target = $region33
    $region32: #{tpu_custom_call.1} parent=1 // pred_region
      _
    $region33: #{tpu_custom_call.1} parent=1 // pred_fallthru
      _
    %v33 = vld [vmem:[%s0] sm:$0xff]
    %v34 = vld [vmem:[%s1] sm:$0xff]
    %v35 = vld [vmem:[%s1 + $0x8] sm:$0xff]
    %v36 = vld [vmem:[%s1 + $0x10] sm:$0xff]
    %v37 = vld [vmem:[%s1 + $0x18] sm:$0xff]
    %v38 = vld [vmem:[%s1 + $0x20] sm:$0xff]
    %v39 = vld [vmem:[%s1 + $0x28] sm:$0xff]
    %v40 = vld [vmem:[%s1 + $0x30] sm:$0xff]
    %v41 = vld [vmem:[%s1 + $0x38] sm:$0xff]
    %v42 = vld [vmem:[%s1 + $0x40] sm:$0xff]
    %v43 = vld [vmem:[%s1 + $0x48] sm:$0xff]
    %v44 = vld [vmem:[%s1 + $0x50] sm:$0xff]
    %v45 = vld [vmem:[%s1 + $0x58] sm:$0xff]
    %v46 = vld [vmem:[%s1 + $0x60] sm:$0xff]
    %v47 = vld [vmem:[%s1 + $0x68] sm:$0xff]
    %v48 = vld [vmem:[%s1 + $0x70] sm:$0xff]
    %v49 = vld [vmem:[%s1 + $0x78] sm:$0xff]
    %v50 = vld [vmem:[%s2] sm:$0x1]
    %v52 = vlaneseq
    %v53 = vshrl.u32 %v52, 7
    %v54 = vsub.s32 0, %v53
    %v55 = vrot.slane %v50, %v54
    %57 = vmatprep.subr.mxu0 0.0
    %58 = vmatpush1.msra.mxu0 %v49
    %59 = vmatprep.subr.mxu0 0.0
    %60 = vmatpush1.msra.mxu0 %v48
    %61 = vmatprep.subr.mxu0 0.0
    %62 = vmatpush1.msra.mxu0 %v47
    %63 = vmatprep.subr.mxu0 0.0
    %64 = vmatpush1.msra.mxu0 %v46
    %65 = vmatprep.subr.mxu0 0.0
    %66 = vmatpush1.msra.mxu0 %v45
    %67 = vmatprep.subr.mxu0 0.0
    %68 = vmatpush1.msra.mxu0 %v44
    %69 = vmatprep.subr.mxu0 0.0
    %70 = vmatpush1.msra.mxu0 %v43
    %71 = vmatprep.subr.mxu0 0.0
    %72 = vmatpush1.msra.mxu0 %v42
    %73 = vmatprep.subr.mxu0 0.0
    %74 = vmatpush1.msra.mxu0 %v41
    %75 = vmatprep.subr.mxu0 0.0
    %76 = vmatpush1.msra.mxu0 %v40
    %77 = vmatprep.subr.mxu0 0.0
    %78 = vmatpush1.msra.mxu0 %v39
    %79 = vmatprep.subr.mxu0 0.0
    %80 = vmatpush1.msra.mxu0 %v38
    %81 = vmatprep.subr.mxu0 0.0
    %82 = vmatpush1.msra.mxu0 %v37
    %83 = vmatprep.subr.mxu0 0.0
    %84 = vmatpush1.msra.mxu0 %v36
    %85 = vmatprep.subr.mxu0 0.0
    %86 = vmatpush1.msra.mxu0 %v35
    %87 = vmatprep.subr.mxu0 0.0
    %88 = vmatpush1.msra.mxu0 %v34
    %89 = vmatprep.subr.mxu0 0.0
    %90 = vmatpush2.msra.mxu0 0.0
    %91 = vmatprep.subr.mxu0 0.0
    %92 = vmatpush2.msra.mxu0 0.0
    %93 = vmatprep.subr.mxu0 0.0
    %94 = vmatpush2.msra.mxu0 0.0
    %95 = vmatprep.subr.mxu0 0.0
    %96 = vmatpush2.msra.mxu0 0.0
    %97 = vmatprep.subr.mxu0 0.0
    %98 = vmatpush2.msra.mxu0 0.0
    %99 = vmatprep.subr.mxu0 0.0
    %100 = vmatpush2.msra.mxu0 0.0
    %101 = vmatprep.subr.mxu0 0.0
    %102 = vmatpush2.msra.mxu0 0.0
    %103 = vmatprep.subr.mxu0 0.0
    %104 = vmatpush2.msra.mxu0 0.0
    %105 = vmatprep.subr.mxu0 0.0
    %106 = vmatpush2.msra.mxu0 0.0
    %107 = vmatprep.subr.mxu0 0.0
    %108 = vmatpush2.msra.mxu0 0.0
    %109 = vmatprep.subr.mxu0 0.0
    %110 = vmatpush2.msra.mxu0 0.0
    %111 = vmatprep.subr.mxu0 0.0
    %112 = vmatpush2.msra.mxu0 0.0
    %113 = vmatprep.subr.mxu0 0.0
    %114 = vmatpush2.msra.mxu0 0.0
    %115 = vmatprep.subr.mxu0 0.0
    %116 = vmatpush2.msra.mxu0 0.0
    %117 = vmatprep.subr.mxu0 0.0
    %118 = vmatpush2.msra.mxu0 0.0
    %119 = vmatprep.subr.mxu0 0.0
    %120 = vmatpush2.msra.mxu0 0.0
    %121 = vmatprep.mubr.f32.mxu0 0.0
    %122 = vmatmul.mubr.f32.gmra.mxu0 %v33
    %v123 = vpop.f32.mrf.mxu0
    %v124 = vadd.f32 %v55, %v123
    %v125 = vpop.f32.mrf.mxu0
    %126 = vdwg.mxu0
    %v127 = vld [vmem:[%s3] sm:$0x1]
    %v129 = vlaneseq
    %v130 = vshrl.u32 %v129, 7
    %v131 = vsub.s32 0, %v130
    %v132 = vrot.slane %v127, %v131
    %v134 = vadd.f32 %v124, %v132
    %v135 = vtanh.pop %v134
    %v136 = vld [vmem:[%s4] sm:$0x1]
    %v138 = vlaneseq
    %v139 = vshrl.u32 %v138, 7
    %v140 = vsub.s32 0, %v139
    %v141 = vrot.slane %v136, %v140
    %v143 = vmul.f32 %v135, %v141
    %v144 = vld [vmem:[%s5] sm:$0x1]
    %v146 = vlaneseq
    %v147 = vshrl.u32 %v146, 7
    %v148 = vsub.s32 0, %v147
    %v149 = vrot.slane %v144, %v148
    %v151 = vsub.f32 %v143, %v149
    %v152 = vround.ne.pseudo %v151
    %v153 = vld [vmem:[%s6] sm:$0xff]
    %v154 = vld [vmem:[%s6 + $0x8] sm:$0xff]
    %v155 = vld [vmem:[%s6 + $0x10] sm:$0xff]
    %v156 = vld [vmem:[%s6 + $0x18] sm:$0xff]
    %vm157 = vcmask 130048
    %v159 = vsel %vm157, %v152, 0
    %161 = vmatprep.subr.mxu0 0.0
    %162 = vmatpush1.msra.mxu0 0.0
    %163 = vmatprep.subr.mxu0 0.0
    %164 = vmatpush1.msra.mxu0 0.0
    %165 = vmatprep.subr.mxu0 0.0
    %166 = vmatpush1.msra.mxu0 0.0
    %167 = vmatprep.subr.mxu0 0.0
    %168 = vmatpush1.msra.mxu0 0.0
    %169 = vmatprep.subr.mxu0 0.0
    %170 = vmatpush1.msra.mxu0 0.0
    %171 = vmatprep.subr.mxu0 0.0
    %172 = vmatpush1.msra.mxu0 0.0
    %173 = vmatprep.subr.mxu0 0.0
    %174 = vmatpush1.msra.mxu0 0.0
    %175 = vmatprep.subr.mxu0 0.0
    %176 = vmatpush1.msra.mxu0 0.0
    %177 = vmatprep.subr.mxu0 0.0
    %178 = vmatpush1.msra.mxu0 0.0
    %179 = vmatprep.subr.mxu0 0.0
    %180 = vmatpush1.msra.mxu0 0.0
    %181 = vmatprep.subr.mxu0 0.0
    %182 = vmatpush1.msra.mxu0 0.0
    %183 = vmatprep.subr.mxu0 0.0
    %184 = vmatpush1.msra.mxu0 0.0
    %185 = vmatprep.subr.mxu0 0.0
    %186 = vmatpush1.msra.mxu0 0.0
    %187 = vmatprep.subr.mxu0 0.0
    %188 = vmatpush1.msra.mxu0 0.0
    %189 = vmatprep.subr.mxu0 %v156
    %190 = vmatpush1.msra.mxu0 %v155
    %191 = vmatprep.subr.mxu0 %v154
    %192 = vmatpush1.msra.mxu0 %v153
    %193 = vmatprep.subr.mxu0 0.0
    %194 = vmatpush2.msra.mxu0 0.0
    %195 = vmatprep.subr.mxu0 0.0
    %196 = vmatpush2.msra.mxu0 0.0
    %197 = vmatprep.subr.mxu0 0.0
    %198 = vmatpush2.msra.mxu0 0.0
    %199 = vmatprep.subr.mxu0 0.0
    %200 = vmatpush2.msra.mxu0 0.0
    %201 = vmatprep.subr.mxu0 0.0
    %202 = vmatpush2.msra.mxu0 0.0
    %203 = vmatprep.subr.mxu0 0.0
    %204 = vmatpush2.msra.mxu0 0.0
    %205 = vmatprep.subr.mxu0 0.0
    %206 = vmatpush2.msra.mxu0 0.0
    %207 = vmatprep.subr.mxu0 0.0
    %208 = vmatpush2.msra.mxu0 0.0
    %209 = vmatprep.subr.mxu0 0.0
    %210 = vmatpush2.msra.mxu0 0.0
    %211 = vmatprep.subr.mxu0 0.0
    %212 = vmatpush2.msra.mxu0 0.0
    %213 = vmatprep.subr.mxu0 0.0
    %214 = vmatpush2.msra.mxu0 0.0
    %215 = vmatprep.subr.mxu0 0.0
    %216 = vmatpush2.msra.mxu0 0.0
    %217 = vmatprep.subr.mxu0 0.0
    %218 = vmatpush2.msra.mxu0 0.0
    %219 = vmatprep.subr.mxu0 0.0
    %220 = vmatpush2.msra.mxu0 0.0
    %221 = vmatprep.subr.mxu0 0.0
    %222 = vmatpush2.msra.mxu0 0.0
    %223 = vmatprep.subr.mxu0 0.0
    %224 = vmatpush2.msra.mxu0 0.0
    %225 = vmatprep.mubr.f32.mxu0 0.0
    %226 = vmatmul.mubr.f32.gmra.mxu0 %v159
    %v227 = vpop.f32.mrf.mxu0
    %v228 = vadd.f32 0.0, %v227
    %v229 = vpop.f32.mrf.mxu0
    %v230 = vadd.f32 0.0, %v229
    %231 = vdwg.mxu0
    %v232 = vld [vmem:[%s7] sm:$0x1]
    %v234 = vlaneseq
    %v235 = vshrl.u32 %v234, 7
    %v236 = vsub.s32 0, %v235
    %v237 = vrot.slane %v232, %v236
    %v239 = vadd.f32 %v228, %v237
    %240 = vst [vmem:[#allocation2] sm:$0xff] %v239
    %v241 = vadd.f32 %v230, 500.0
    %v242 = vcvt.f32.s32.ties.to.even %v241
    %vm243 = vcmask 31744
    %244 = vst.msk [vmem:[#allocation4] sm:$0xff] %vm243, %v242
    // Predicated region
    $region34: #{tpu_custom_call.1} parent=1 // pred_check
      _
    $region35: #{tpu_custom_call.1} parent=1 // pred_check_branch
      %246 = sbr.rel (0) target = $region37
    $region36: #{tpu_custom_call.1} parent=1 // pred_region
      %s248 = ssub.s32 128, 64
      %249 = vsyncadd [#allocation3], %s248
      %s250 = sshll.u32 [#allocation2], 4
      %s251 = int_to_ptr.vmem [resolvable:$true] %s250
      %256 = dma.vmem_to_hbm [thread:$0]  %s251, 64, %s8, [#allocation3], 64, 64, 4
    $region37: #{tpu_custom_call.1} parent=1 // pred_fallthru
      _
    // Predicated region
    $region38: #{tpu_custom_call.1} parent=1 // pred_check
      _
    $region39: #{tpu_custom_call.1} parent=1 // pred_check_branch
      %258 = sbr.rel (0) target = $region41
    $region40: #{tpu_custom_call.1} parent=1 // pred_region
      %s260 = ssub.s32 128, 64
      %261 = vsyncadd [#allocation5], %s260
      %s262 = sshll.u32 [#allocation4], 4
      %s263 = int_to_ptr.vmem [resolvable:$true] %s262
      %268 = dma.vmem_to_hbm [thread:$0]  %s263, 64, %s9, [#allocation5], 64, 64, 4
    $region41: #{tpu_custom_call.1} parent=1 // pred_fallthru
      _
    // Predicated region
    $region42: #{tpu_custom_call.1} parent=1 // pred_check
      _
    $region43: #{tpu_custom_call.1} parent=1 // pred_check_branch
      %270 = sbr.rel (0) target = $region45
    $region44: #{tpu_custom_call.1} parent=1 // pred_region
      %271 = dma.done [#allocation3], 128
    $region45: #{tpu_custom_call.1} parent=1 // pred_fallthru
      _
    // Predicated region
    $region46: #{tpu_custom_call.1} parent=1 // pred_check
      _
    $region47: #{tpu_custom_call.1} parent=1 // pred_check_branch
      %273 = sbr.rel (0) target = $region49
    $region48: #{tpu_custom_call.1} parent=1 // pred_region
      %274 = dma.done [#allocation5], 128
    $region49: #{tpu_custom_call.1} parent=1 // pred_fallthru
      _
    %275 = vsyncpa [#allocation3], 1
    %276 = vsyncpa [#allocation5], 1

</llo_original>
